<compile_context>
chip_gen: v7x
topology: tpu7x:2x2x1
jax: 0.10.0
libtpu: 0.0.40
codegen_flags: <defaults>
</compile_context>

<pallas_src>
import functools

import jax
import jax.numpy as jnp
from jax.experimental import pallas as pl
from jax.experimental.pallas import tpu as pltpu

IGNORE_INDEX = -100
LANES = 128
MAX_ROW_TILE = 2048   # 2048 * 128 * 4B = 1 MiB per f32 input block


def _masked_mse_kernel(pred_ref, tgt_ref, sq_ref, cnt_ref, acc_sq, acc_cnt, *,
                       num_blocks, tail_rows, row_tile):
    i = pl.program_id(0)

    @pl.when(i == 0)
    def _():
        acc_sq[...] = jnp.zeros_like(acc_sq)
        acc_cnt[...] = jnp.zeros_like(acc_cnt)

    # Load in native dtype, upcast on the VPU.
    t = tgt_ref[...].astype(jnp.float32)
    p = pred_ref[...].astype(jnp.float32)
    d = p - t
    value_keep = t != jnp.float32(IGNORE_INDEX)

    def accumulate(keep):
        # jnp.where (select) kills any NaN/Inf coming from undefined edge-block
        # data or from prediction values at ignored positions.
        acc_sq[...] += jnp.where(keep, d * d, jnp.float32(0.0))
        acc_cnt[...] += keep.astype(jnp.float32)

    if tail_rows == 0:
        # Every block is fully in range: value mask only (fast path everywhere).
        accumulate(value_keep)
    else:
        # Interior blocks: fast path (no iota / range mask).
        @pl.when(i < num_blocks - 1)
        def _():
            accumulate(value_keep)

        # Last block is ragged: mask rows past the array extent.  tail_rows is
        # a static Python int, so this whole branch is only paid once.
        @pl.when(i == num_blocks - 1)
        def _():
            row_ids = jax.lax.broadcasted_iota(jnp.int32, (row_tile, LANES), 0)
            accumulate(jnp.logical_and(row_ids < tail_rows, value_keep))

    # Finalize: one sublane reduce per accumulator, tiny (1, 128) writeback.
    @pl.when(i == num_blocks - 1)
    def _():
        sq_ref[...] = acc_sq[...].sum(axis=0, keepdims=True)
        cnt_ref[...] = acc_cnt[...].sum(axis=0, keepdims=True)


def ignore_masking_mse_loss(prediction, target, ignore_index=IGNORE_INDEX):
    assert ignore_index == IGNORE_INDEX  # kernel specialized on the constant
    pred = prediction.reshape(-1)
    tgt = target.reshape(-1)
    n = pred.shape[0]
    if n == 0:
        return jnp.float32(jnp.nan)   # mean of empty selection

    # Lane alignment.  When n % 128 == 0 (common case) the reshape below is a
    # free bitcast.  Otherwise pad the flat arrays by < 128 elements; padded
    # targets = ignore_index so the value mask excludes them.
    pad = (-n) % LANES
    if pad:
        pred = jnp.pad(pred, (0, pad))
        tgt = jnp.pad(tgt, (0, pad), constant_values=ignore_index)
    rows = (n + pad) // LANES
    pred2d = pred.reshape(rows, LANES)
    tgt2d = tgt.reshape(rows, LANES)

    # Tile / grid geometry (all static Python ints).
    row_tile = rows if rows <= MAX_ROW_TILE else MAX_ROW_TILE
    num_blocks = pl.cdiv(rows, row_tile)
    tail_rows = rows - (num_blocks - 1) * row_tile
    if tail_rows == row_tile:
        tail_rows = 0            # statically known: no ragged last block

    kernel = functools.partial(
        _masked_mse_kernel,
        num_blocks=num_blocks,
        tail_rows=tail_rows,
        row_tile=row_tile,
    )

    part_shape = jax.ShapeDtypeStruct((1, LANES), jnp.float32)
    in_bytes = (pred2d.size * pred2d.dtype.itemsize
                + tgt2d.size * tgt2d.dtype.itemsize)
    out_bytes = 2 * LANES * 4
    cost = pl.CostEstimate(flops=6 * n, transcendentals=0,
                           bytes_accessed=in_bytes + out_bytes)

    part_sq, part_cnt = pl.pallas_call(
        kernel,
        out_shape=(part_shape, part_shape),
        grid_spec=pltpu.PrefetchScalarGridSpec(
            num_scalar_prefetch=0,
            grid=(num_blocks,),
            in_specs=[
                pl.BlockSpec((row_tile, LANES), lambda i: (i, 0)),
                pl.BlockSpec((row_tile, LANES), lambda i: (i, 0)),
            ],
            out_specs=[
                pl.BlockSpec((1, LANES), lambda i: (0, 0)),
                pl.BlockSpec((1, LANES), lambda i: (0, 0)),
            ],
            scratch_shapes=[
                pltpu.VMEM((row_tile, LANES), jnp.float32),
                pltpu.VMEM((row_tile, LANES), jnp.float32),
            ],
        ),
        compiler_params=pltpu.CompilerParams(
            dimension_semantics=("arbitrary",),
            # ~6 MiB double-buffered footprint at MAX_ROW_TILE=2048: fits the
            # default scoped VMEM on v5e/v6e/v7x -> no explicit limit needed.
        ),
        cost_estimate=cost,
    )(pred2d, tgt2d)

    # Tiny final reduce + divide (128 partials each).  count==0 -> NaN, by design.
    return jnp.sum(part_sq) / jnp.sum(part_cnt)


def _reference(prediction, target, ignore_index=IGNORE_INDEX):
    p = prediction.astype(jnp.float32)
    t = target.astype(jnp.float32)
    m = t != jnp.float32(ignore_index)
    return jnp.sum(jnp.where(m, (p - t) ** 2, 0.0)) / jnp.sum(m.astype(jnp.float32))


if __name__ == "__main__":
    key = jax.random.PRNGKey(0)

    tests = [
        # (shape, dtype, ignore_frac, tol)
        ((2, 4, 16, 16), jnp.float32, 0.30, 1e-6),    # lane-aligned, single block
        ((2, 3, 17, 13), jnp.float32, 0.25, 1e-6),    # n % 128 != 0 -> pad path
        ((4, 10, 100, 80), jnp.float32, 0.30, 1e-4),  # multi-block + ragged last block
        ((2, 4, 16, 16), jnp.bfloat16, 0.30, 1e-3),   # native low-precision dtype path
    ]

    for idx, (shape, dtype, frac, tol) in enumerate(tests):
        key, k_pred, k_tgt, k_mask = jax.random.split(key, 4)
        prediction = jax.random.normal(k_pred, shape, dtype=jnp.float32)
        target = jax.random.normal(k_tgt, shape, dtype=jnp.float32)
        ignore = jax.random.uniform(k_mask, shape) < frac
        target = jnp.where(ignore, jnp.float32(IGNORE_INDEX), target)
        prediction = prediction.astype(dtype)
        target = target.astype(dtype)

        loss = ignore_masking_mse_loss(prediction, target)
        jax.block_until_ready(loss)

        ref = _reference(prediction, target)
        assert jnp.allclose(loss, ref, rtol=tol, atol=tol), (idx, loss, ref)

    print("KERNEL_OK")
</pallas_src>

<mosaic_0001>
module attributes {stable_mosaic.version = 11 : i64} {
  func.func @_masked_mse_kernel(%arg0: i32, %arg1: memref<16x128xf32, #tpu.memory_space<vmem>>, %arg2: memref<16x128xf32, #tpu.memory_space<vmem>>, %arg3: memref<1x128xf32, #tpu.memory_space<vmem>>, %arg4: memref<1x128xf32, #tpu.memory_space<vmem>>, %arg5: memref<16x128xf32, #tpu.memory_space<vmem>>, %arg6: memref<16x128xf32, #tpu.memory_space<vmem>>) attributes {dimension_semantics = [#tpu.dimension_semantics<arbitrary>], iteration_bounds = array<i64: 1>, scalar_prefetch = 0 : i64, scratch_operands = 2 : i64, tpu.core_type = #tpu.core_type<tc>, window_params = [{transform_indices = @transform_0, window_bounds = array<i64: 16, 128>}, {transform_indices = @transform_1, window_bounds = array<i64: 16, 128>}, {pipeline_mode = #tpu.pipeline_mode<synchronous>, transform_indices = @transform_2, window_bounds = array<i64: 1, 128>}, {pipeline_mode = #tpu.pipeline_mode<synchronous>, transform_indices = @transform_3, window_bounds = array<i64: 1, 128>}]} {
    %c0_i32 = arith.constant 0 : i32
    %0 = arith.cmpi eq, %arg0, %c0_i32 : i32
    %1 = arith.extui %0 : i1 to i32
    %c0_i32_0 = arith.constant 0 : i32
    %2 = arith.cmpi ne, %1, %c0_i32_0 : i32
    scf.if %2 {
      %cst_15 = arith.constant 0.000000e+00 : f32
      %22 = vector.broadcast %cst_15 : f32 to vector<16x128xf32>
      %c0_16 = arith.constant 0 : index
      %c0_17 = arith.constant 0 : index
      %23 = vector.load %arg5[%c0_16, %c0_17] : memref<16x128xf32, #tpu.memory_space<vmem>>, vector<16x128xf32>
      tpu.vector_store %arg5[%c0_16, %c0_17], %22 {strides = array<i32>} : memref<16x128xf32, #tpu.memory_space<vmem>>, vector<16x128xf32>,
      %cst_18 = arith.constant 0.000000e+00 : f32
      %24 = vector.broadcast %cst_18 : f32 to vector<16x128xf32>
      %c0_19 = arith.constant 0 : index
      %c0_20 = arith.constant 0 : index
      %25 = vector.load %arg6[%c0_19, %c0_20] : memref<16x128xf32, #tpu.memory_space<vmem>>, vector<16x128xf32>
      tpu.vector_store %arg6[%c0_19, %c0_20], %24 {strides = array<i32>} : memref<16x128xf32, #tpu.memory_space<vmem>>, vector<16x128xf32>,
    } else {
    }
    %c0 = arith.constant 0 : index
    %c0_1 = arith.constant 0 : index
    %3 = vector.load %arg2[%c0, %c0_1] : memref<16x128xf32, #tpu.memory_space<vmem>>, vector<16x128xf32>
    %c0_2 = arith.constant 0 : index
    %c0_3 = arith.constant 0 : index
    %4 = vector.load %arg1[%c0_2, %c0_3] : memref<16x128xf32, #tpu.memory_space<vmem>>, vector<16x128xf32>
    %5 = arith.subf %4, %3 : vector<16x128xf32>
    %cst = arith.constant -1.000000e+02 : f32
    %6 = vector.broadcast %cst : f32 to vector<16x128xf32>
    %7 = arith.cmpf one, %3, %6 : vector<16x128xf32>
    %c0_4 = arith.constant 0 : index
    %c0_5 = arith.constant 0 : index
    %8 = vector.load %arg5[%c0_4, %c0_5] : memref<16x128xf32, #tpu.memory_space<vmem>>, vector<16x128xf32>
    %9 = arith.mulf %5, %5 : vector<16x128xf32>
    %cst_6 = arith.constant 0.000000e+00 : f32
    %10 = vector.broadcast %cst_6 : f32 to vector<16x128xf32>
    %11 = arith.select %7, %9, %10 : vector<16x128xi1>, vector<16x128xf32>
    %12 = arith.addf %8, %11 : vector<16x128xf32>
    %c0_7 = arith.constant 0 : index
    %c0_8 = arith.constant 0 : index
    %13 = vector.load %arg5[%c0_7, %c0_8] : memref<16x128xf32, #tpu.memory_space<vmem>>, vector<16x128xf32>
    tpu.vector_store %arg5[%c0_7, %c0_8], %12 {strides = array<i32>} : memref<16x128xf32, #tpu.memory_space<vmem>>, vector<16x128xf32>,
    %c0_9 = arith.constant 0 : index
    %c0_10 = arith.constant 0 : index
    %14 = vector.load %arg6[%c0_9, %c0_10] : memref<16x128xf32, #tpu.memory_space<vmem>>, vector<16x128xf32>
    %15 = arith.extui %7 : vector<16x128xi1> to vector<16x128xi32>
    %16 = arith.sitofp %15 : vector<16x128xi32> to vector<16x128xf32>
    %17 = arith.addf %14, %16 : vector<16x128xf32>
    %c0_11 = arith.constant 0 : index
    %c0_12 = arith.constant 0 : index
    %18 = vector.load %arg6[%c0_11, %c0_12] : memref<16x128xf32, #tpu.memory_space<vmem>>, vector<16x128xf32>
    tpu.vector_store %arg6[%c0_11, %c0_12], %17 {strides = array<i32>} : memref<16x128xf32, #tpu.memory_space<vmem>>, vector<16x128xf32>,
    %c0_i32_13 = arith.constant 0 : i32
    %19 = arith.cmpi eq, %arg0, %c0_i32_13 : i32
    %20 = arith.extui %19 : i1 to i32
    %c0_i32_14 = arith.constant 0 : i32
    %21 = arith.cmpi ne, %20, %c0_i32_14 : i32
    scf.if %21 {
      %c0_15 = arith.constant 0 : index
      %c0_16 = arith.constant 0 : index
      %22 = vector.load %arg5[%c0_15, %c0_16] : memref<16x128xf32, #tpu.memory_space<vmem>>, vector<16x128xf32>
      %cst_17 = arith.constant dense<0.000000e+00> : vector<128xf32>
      %23 = vector.multi_reduction <add>, %22, %cst_17 [0] : vector<16x128xf32> to vector<128xf32>
      %24 = vector.shape_cast %23 : vector<128xf32> to vector<1x128xf32>
      %c0_18 = arith.constant 0 : index
      %c0_19 = arith.constant 0 : index
      %25 = vector.load %arg3[%c0_18, %c0_19] : memref<1x128xf32, #tpu.memory_space<vmem>>, vector<1x128xf32>
      tpu.vector_store %arg3[%c0_18, %c0_19], %24 {strides = array<i32>} : memref<1x128xf32, #tpu.memory_space<vmem>>, vector<1x128xf32>,
      %c0_20 = arith.constant 0 : index
      %c0_21 = arith.constant 0 : index
      %26 = vector.load %arg6[%c0_20, %c0_21] : memref<16x128xf32, #tpu.memory_space<vmem>>, vector<16x128xf32>
      %cst_22 = arith.constant dense<0.000000e+00> : vector<128xf32>
      %27 = vector.multi_reduction <add>, %26, %cst_22 [0] : vector<16x128xf32> to vector<128xf32>
      %28 = vector.shape_cast %27 : vector<128xf32> to vector<1x128xf32>
      %c0_23 = arith.constant 0 : index
      %c0_24 = arith.constant 0 : index
      %29 = vector.load %arg4[%c0_23, %c0_24] : memref<1x128xf32, #tpu.memory_space<vmem>>, vector<1x128xf32>
      tpu.vector_store %arg4[%c0_23, %c0_24], %28 {strides = array<i32>} : memref<1x128xf32, #tpu.memory_space<vmem>>, vector<1x128xf32>,
    } else {
    }
    return
  }
  func.func @transform_0(%arg0: i32) -> (i32, i32) {
    %c0_i32 = arith.constant 0 : i32
    %c0_i32_0 = arith.constant 0 : i32
    return %arg0, %c0_i32 : i32, i32
  }
  func.func @transform_1(%arg0: i32) -> (i32, i32) {
    %c0_i32 = arith.constant 0 : i32
    %c0_i32_0 = arith.constant 0 : i32
    return %arg0, %c0_i32 : i32, i32
  }
  func.func @transform_2(%arg0: i32) -> (i32, i32) {
    %c0_i32 = arith.constant 0 : i32
    %c0_i32_0 = arith.constant 0 : i32
    %c0_i32_1 = arith.constant 0 : i32
    return %c0_i32, %c0_i32_0 : i32, i32
  }
  func.func @transform_3(%arg0: i32) -> (i32, i32) {
    %c0_i32 = arith.constant 0 : i32
    %c0_i32_0 = arith.constant 0 : i32
    %c0_i32_1 = arith.constant 0 : i32
    return %c0_i32, %c0_i32_0 : i32, i32
  }
}

</mosaic_0001>

<llo_original>
// kernel: tpu_custom_call.1
$region0: #{tpu_custom_call.1}
  #allocation0 [shape = 'u32[]', space=smem, size = 0x4, offset = 0x4, fixed_abs, tag = 'smem constant byte address 0x4 - core index']
  #allocation1 [shape = 'u32[144,128]{1,0:T(1,128)}', space=vmem, size = 0x12000, scoped, tag = 'internal scratch']
  #allocation2 [shape = 'f32[16,128]{1,0:T(8,128)}', space=vmem, size = 0x2000, scoped, tag = 'scratch operand']
  #allocation3 [shape = 'f32[16,128]{1,0:T(8,128)}', space=vmem, size = 0x2000, scoped, tag = 'scratch operand']
  %s0 = inlined_call_operand.hbm [shape: f32[16,128], index: 0, kind: input, shape index: {}]
  %s1 = inlined_call_operand.hbm [shape: f32[16,128], index: 1, kind: input, shape index: {}]
  %s2 = inlined_call_operand.hbm [shape: f32[1,128], index: 2, kind: output, shape index: {0}]
  %s3 = inlined_call_operand.hbm [shape: f32[1,128], index: 3, kind: output, shape index: {1}]
  %4 = xla_tuple %s2, %s3
  %s5 = sld [smem:[#allocation0]]
  $region42: #{tpu_custom_call.1} parent=0
    _
  %s7 = ssub.s32 1, %s5
  %s8 = scalar_select 0, %s7, %s5
  $region1: #{tpu_custom_call.1} parent=0
    #allocation4 [shape = 'u8[8192]{0}', space=vmem, size = 0x2000, scoped, tag = 'input window, operand 0, single buffered']
    #allocation5 [shape = 's32[1]{0}', space=sflag, size = 0x4, scoped, tag = 'scoped memory for tpu_custom_call.1']
    #allocation6 [shape = 's32[1]{0}', space=sflag, size = 0x4, scoped, tag = 'scoped memory for tpu_custom_call.1']
    #allocation7 [shape = 'u8[8192]{0}', space=vmem, size = 0x2000, scoped, tag = 'input window, operand 1, single buffered']
    #allocation8 [shape = 's32[1]{0}', space=sflag, size = 0x4, scoped, tag = 'scoped memory for tpu_custom_call.1']
    #allocation9 [shape = 'u8[512]{0}', space=vmem, size = 0x400, scoped, tag = 'output window, operand 0, single buffered']
    #allocation10 [shape = 'u8[512]{0}', space=vmem, size = 0x400, scoped, tag = 'output window, operand 1, single buffered']
    #allocation11 [shape = 's32[1]{0}', space=sflag, size = 0x4, scoped, tag = 'scoped memory for tpu_custom_call.1']
    %9 = vsyncpa [#allocation5], 0
    %10 = vsyncpa [#allocation8], 0
    %11 = vsyncpa [#allocation6], 0
    %12 = vsyncpa [#allocation11], 0
    // Predicated region
    $region2: #{tpu_custom_call.1} parent=1 // pred_check
      _
    $region3: #{tpu_custom_call.1} parent=1 // pred_check_branch
      %14 = sbr.rel (0) target = $region5
    $region4: #{tpu_custom_call.1} parent=1 // pred_region
      %s16 = ssub.s32 256, 256
      %17 = vsyncadd [#allocation5], %s16
      %s18 = sshll.u32 [#allocation4], 4
      %s19 = int_to_ptr.vmem [resolvable:$true] %s18
      %24 = dma.hbm_to_vmem [thread:$0]  %s0, 256, %s19, [#allocation5], 128, 128, 8
    $region5: #{tpu_custom_call.1} parent=1 // pred_fallthru
      _
    // Predicated region
    $region6: #{tpu_custom_call.1} parent=1 // pred_check
      _
    $region7: #{tpu_custom_call.1} parent=1 // pred_check_branch
      %26 = sbr.rel (0) target = $region9
    $region8: #{tpu_custom_call.1} parent=1 // pred_region
      %s28 = ssub.s32 256, 256
      %29 = vsyncadd [#allocation8], %s28
      %s30 = sshll.u32 [#allocation7], 4
      %s31 = int_to_ptr.vmem [resolvable:$true] %s30
      %36 = dma.hbm_to_vmem [thread:$0]  %s1, 256, %s31, [#allocation8], 128, 128, 8
    $region9: #{tpu_custom_call.1} parent=1 // pred_fallthru
      _
    // Predicated region
    $region10: #{tpu_custom_call.1} parent=1 // pred_check
      _
    $region11: #{tpu_custom_call.1} parent=1 // pred_check_branch
      %38 = sbr.rel (0) target = $region13
    $region12: #{tpu_custom_call.1} parent=1 // pred_region
      %39 = dma.done [#allocation5], 256
    $region13: #{tpu_custom_call.1} parent=1 // pred_fallthru
      _
    // Predicated region
    $region14: #{tpu_custom_call.1} parent=1 // pred_check
      _
    $region15: #{tpu_custom_call.1} parent=1 // pred_check_branch
      %41 = sbr.rel (0) target = $region17
    $region16: #{tpu_custom_call.1} parent=1 // pred_region
      %42 = dma.done [#allocation8], 256
    $region17: #{tpu_custom_call.1} parent=1 // pred_fallthru
      _
    %p43 = scmp.eq.s32.totalorder 0, 0
    // Predicated region
    $region18: #{tpu_custom_call.1} parent=1 // pred_check
      %p44 = pneg %p43
    $region19: #{tpu_custom_call.1} parent=1 // pred_check_branch
      %46 = sbr.rel (%p44) target = $region21
    $region20: #{tpu_custom_call.1} parent=1 // pred_region
      %47 = vst [vmem:[#allocation2] sm:$0xff] 0.0
      %48 = vst [vmem:[#allocation2 + $0x8] sm:$0xff] 0.0
      %49 = vst [vmem:[#allocation3] sm:$0xff] 0.0
      %50 = vst [vmem:[#allocation3 + $0x8] sm:$0xff] 0.0
    $region21: #{tpu_custom_call.1} parent=1 // pred_fallthru
      _
    %v51 = vld [vmem:[#allocation7] sm:$0xff]
    %v52 = vld [vmem:[#allocation7 + $0x8] sm:$0xff]
    %v53 = vld [vmem:[#allocation4] sm:$0xff]
    %v54 = vld [vmem:[#allocation4 + $0x8] sm:$0xff]
    %v55 = vsub.f32 %v53, %v51
    %v56 = vsub.f32 %v54, %v52
    %vm57 = vcmp.ne.f32.partialorder %v51, -100.0
    %vm58 = vcmp.ne.f32.partialorder %v52, -100.0
    %v59 = vld [vmem:[#allocation2] sm:$0xff]
    %v60 = vld [vmem:[#allocation2 + $0x8] sm:$0xff]
    %v61 = vmul.f32 %v55, %v55
    %v62 = vmul.f32 %v56, %v56
    %v63 = vsel %vm57, %v61, 0.0
    %v64 = vsel %vm58, %v62, 0.0
    %v65 = vadd.f32 %v59, %v63
    %v66 = vadd.f32 %v60, %v64
    %67 = vst [vmem:[#allocation2] sm:$0xff] %v65
    %68 = vst [vmem:[#allocation2 + $0x8] sm:$0xff] %v66
    %v69 = vld [vmem:[#allocation3] sm:$0xff]
    %v70 = vld [vmem:[#allocation3 + $0x8] sm:$0xff]
    %v71 = vsel %vm57, 1, 0
    %v72 = vsel %vm58, 1, 0
    %v73 = vcvt.s32.f32 %v71
    %v74 = vcvt.s32.f32 %v72
    %v75 = vadd.f32 %v69, %v73
    %v76 = vadd.f32 %v70, %v74
    %77 = vst [vmem:[#allocation3] sm:$0xff] %v75
    %78 = vst [vmem:[#allocation3 + $0x8] sm:$0xff] %v76
    // Predicated region
    $region22: #{tpu_custom_call.1} parent=1 // pred_check
      %p79 = pneg %p43
    $region23: #{tpu_custom_call.1} parent=1 // pred_check_branch
      %81 = sbr.rel (%p79) target = $region25
    $region24: #{tpu_custom_call.1} parent=1 // pred_region
      %v82 = vld [vmem:[#allocation2] sm:$0xff]
      %v83 = vld [vmem:[#allocation2 + $0x8] sm:$0xff]
      %v84 = vadd.f32 %v82, %v83
      %v85 = vrot.slane %v84, 4
      %v86 = vadd.f32 %v84, %v85
      %v87 = vrot.slane %v86, 2
      %v88 = vadd.f32 %v86, %v87
      %v89 = vrot.slane %v88, 1
      %v90 = vadd.f32 %v88, %v89
      %91 = vst [vmem:[#allocation9] sm:$0x1] %v90
      %v92 = vld [vmem:[#allocation3] sm:$0xff]
      %v93 = vld [vmem:[#allocation3 + $0x8] sm:$0xff]
      %v94 = vadd.f32 %v92, %v93
      %v95 = vrot.slane %v94, 4
      %v96 = vadd.f32 %v94, %v95
      %v97 = vrot.slane %v96, 2
      %v98 = vadd.f32 %v96, %v97
      %v99 = vrot.slane %v98, 1
      %v100 = vadd.f32 %v98, %v99
      %101 = vst [vmem:[#allocation10] sm:$0x1] %v100
    $region25: #{tpu_custom_call.1} parent=1 // pred_fallthru
      _
    // Predicated region
    $region26: #{tpu_custom_call.1} parent=1 // pred_check
      _
    $region27: #{tpu_custom_call.1} parent=1 // pred_check_branch
      %103 = sbr.rel (0) target = $region29
    $region28: #{tpu_custom_call.1} parent=1 // pred_region
      %s105 = ssub.s32 16, 16
      %106 = vsyncadd [#allocation6], %s105
      %s108 = sshll.u32 [#allocation9], 4
      %s109 = int_to_ptr.vmem [resolvable:$true] %s108
      %111 = dma.vmem_to_hbm [thread:$0]  %s109, 16, %s2, [#allocation6]
    $region29: #{tpu_custom_call.1} parent=1 // pred_fallthru
      _
    // Predicated region
    $region30: #{tpu_custom_call.1} parent=1 // pred_check
      _
    $region31: #{tpu_custom_call.1} parent=1 // pred_check_branch
      %113 = sbr.rel (0) target = $region33
    $region32: #{tpu_custom_call.1} parent=1 // pred_region
      %s115 = ssub.s32 16, 16
      %116 = vsyncadd [#allocation11], %s115
      %s118 = sshll.u32 [#allocation10], 4
      %s119 = int_to_ptr.vmem [resolvable:$true] %s118
      %121 = dma.vmem_to_hbm [thread:$0]  %s119, 16, %s3, [#allocation11]
    $region33: #{tpu_custom_call.1} parent=1 // pred_fallthru
      _
    // Predicated region
    $region34: #{tpu_custom_call.1} parent=1 // pred_check
      _
    $region35: #{tpu_custom_call.1} parent=1 // pred_check_branch
      %123 = sbr.rel (0) target = $region37
    $region36: #{tpu_custom_call.1} parent=1 // pred_region
      %124 = dma.done [#allocation6], 16
    $region37: #{tpu_custom_call.1} parent=1 // pred_fallthru
      _
    // Predicated region
    $region38: #{tpu_custom_call.1} parent=1 // pred_check
      _
    $region39: #{tpu_custom_call.1} parent=1 // pred_check_branch
      %126 = sbr.rel (0) target = $region41
    $region40: #{tpu_custom_call.1} parent=1 // pred_region
      %127 = dma.done [#allocation11], 16
    $region41: #{tpu_custom_call.1} parent=1 // pred_fallthru
      _
    %128 = vsyncpa [#allocation5], 1
    %129 = vsyncpa [#allocation8], 1
    %130 = vsyncpa [#allocation6], 1
    %131 = vsyncpa [#allocation11], 1

</llo_original>
